<compile_context>
chip_gen: v7x
topology: tpu7x:2x2x1
jax: 0.10.0
libtpu: 0.0.40
codegen_flags: <defaults>
</compile_context>

<pallas_src>
import functools
import math

import jax
import jax.numpy as jnp
from jax.experimental import pallas as pl
from jax.experimental.pallas import tpu as pltpu


def _get_emb(sin_inp):
    # interleave sin/cos along the last dim, matching positional_encodings.get_emb
    emb = jnp.stack([jnp.sin(sin_inp), jnp.cos(sin_inp)], axis=-1)
    return emb.reshape(sin_inp.shape[0], -1)


def positional_encoding_2d(pos_dim, h, w, dtype=jnp.float32):
    """PositionalEncodingPermute2D(pos_dim) applied to an NCHW tensor with C == pos_dim.

    Returns the encoding in channel-first layout: (pos_dim, h, w).
    """
    channels = int(math.ceil(pos_dim / 4) * 2)
    inv_freq = 1.0 / (10000.0 ** (jnp.arange(0, channels, 2, dtype=jnp.float32) / channels))
    pos_x = jnp.arange(h, dtype=jnp.float32)
    pos_y = jnp.arange(w, dtype=jnp.float32)
    emb_x = _get_emb(pos_x[:, None] * inv_freq[None, :])  # (h, channels)
    emb_y = _get_emb(pos_y[:, None] * inv_freq[None, :])  # (w, channels)
    emb = jnp.zeros((h, w, 2 * channels), dtype)
    emb = emb.at[:, :, :channels].set(emb_x[:, None, :])
    emb = emb.at[:, :, channels:2 * channels].set(emb_y[None, :, :])
    enc = emb[:, :, :pos_dim]              # slice to input channel count (== pos_dim)
    return jnp.transpose(enc, (2, 0, 1))   # (pos_dim, h, w)


def _spatial_softmax_kernel(temp_ref, x_ref, p_ref, out_ref):
    # temp_ref: SMEM (1,) f32 temperature
    # x_ref:   VMEM (TM, HW)          -- TM rows of the flattened (B*C, HW) feature map
    # p_ref:   VMEM (HW, POS_DIM + 1) -- positional encoding; last column is a spare lane
    # out_ref: VMEM (TM, POS_DIM + 1) -- [:, :POS_DIM] keypoints, [:, POS_DIM] presence
    x = x_ref[...].astype(jnp.float32)                        # (TM, HW)
    inv_t = 1.0 / temp_ref[0]                                 # one scalar reciprocal

    # Single cross-lane reduction over HW: it is the presence activation (max of the
    # unscaled feature) and, scaled, the softmax stabilizer.  Softmax is shift invariant,
    # and for the module's positive temperature max_x*inv_t is exactly the max of the
    # scaled logits, so the standard overflow guard is preserved.
    max_x = jnp.max(x, axis=-1, keepdims=True)                # (TM, 1)

    e = jnp.exp((x - max_x) * inv_t)                          # (TM, HW) unnormalized weights
    s = jnp.sum(e, axis=-1, keepdims=True)                    # (TM, 1) softmax denominator

    # Weighted positions on the MXU.  Normalization is deferred past the matmul so the
    # divide only touches the (TM, POS_DIM+1) result instead of the (TM, HW) weights.
    # (Kept exact: the reciprocal runs on a (TM, 1) column, so approx=True buys nothing,
    # and f32 LHS keeps the 1e-5 reference match.)
    kp = jnp.dot(e, p_ref[...], preferred_element_type=jnp.float32)   # (TM, POS_DIM+1)
    kp = kp * pl.reciprocal(s, approx=False)

    # Splice the presence activation into the last lane (that lane of the matmul result
    # is overwritten): one fused store, no in-kernel concat, no second output stream.
    col = jax.lax.broadcasted_iota(jnp.int32, kp.shape, 1)
    out = jnp.where(col < kp.shape[-1] - 1, kp, max_x)
    out_ref[...] = out.astype(out_ref.dtype)


def _pick_row_tile(rows, hw, out_cols, vmem_budget_bytes):
    """Largest row tile: multiple of 8 (rounded to 256-multiples once >= 256 so the MXU
    sees full-height tiles), capped at 2048, sized so the double-buffered x / fused-out
    tiles plus the lane-padded positional table fit the VMEM budget (v7x: 64 MiB/TC)."""
    lane = 128
    pad_l = lambda n: ((n + lane - 1) // lane) * lane
    pad_s = lambda n: ((n + 7) // 8) * 8
    fixed = 2 * pad_s(hw) * pad_l(out_cols) * 4              # P table (conservatively x2)
    per_row = (2 * pad_l(hw) + 2 * pad_l(out_cols)) * 4      # x + fused out, 2 buffers, f32
    tm = max(0, vmem_budget_bytes - fixed) // per_row
    tm = max(8, min(2048, (tm // 8) * 8))
    if tm >= 256:                                            # fill 256-wide MXU tiles on v6e/v7x
        tm = (tm // 256) * 256
    rows_padded8 = ((rows + 7) // 8) * 8
    return min(tm, rows_padded8)


@functools.partial(jax.jit, static_argnums=(2,))
def spatial_softmax_positional(x, temperature, pos_dim):
    """x: (B, C, H, W); temperature: (1,) float32 parameter.  Returns (B, C*(pos_dim+1))."""
    b, c, h, w = x.shape
    hw = h * w
    rows = b * c
    out_cols = pos_dim + 1

    x_rows = x.reshape(rows, hw)

    # Positional encoding, flattened and transposed for the matmul, padded with one spare
    # column so the MXU directly produces the fused (keypoints | presence) output width.
    p = positional_encoding_2d(pos_dim, h, w, dtype=jnp.float32).reshape(pos_dim, hw).T
    p_aug = jnp.concatenate([p, jnp.zeros((hw, 1), jnp.float32)], axis=-1)  # (HW, POS_DIM+1)

    tm = _pick_row_tile(rows, hw, out_cols, vmem_budget_bytes=40 * 1024 * 1024)
    rows_padded = pl.cdiv(rows, tm) * tm
    if rows_padded != rows:
        # zero rows are harmless (uniform softmax, finite outputs) and sliced off below
        x_rows = jnp.pad(x_rows, ((0, rows_padded - rows), (0, 0)))

    out = pl.pallas_call(
        _spatial_softmax_kernel,
        out_shape=jax.ShapeDtypeStruct((rows_padded, out_cols), x.dtype),
        grid_spec=pltpu.PrefetchScalarGridSpec(
            num_scalar_prefetch=0,
            grid=(rows_padded // tm,),
            in_specs=[
                pl.BlockSpec(memory_space=pltpu.SMEM),               # temperature (1,)
                pl.BlockSpec((tm, hw), lambda i: (i, 0)),            # x row tile
                pl.BlockSpec((hw, out_cols), lambda i: (0, 0)),      # P (fetched once)
            ],
            out_specs=pl.BlockSpec((tm, out_cols), lambda i: (i, 0)),
        ),
        compiler_params=pltpu.CompilerParams(
            dimension_semantics=("parallel",),   # row-tile axis shards across v7x's 2 TCs
            vmem_limit_bytes=48 * 1024 * 1024,   # raise default scoped VMEM, below v7x's 64 MiB
        ),
    )(temperature.astype(jnp.float32), x_rows, p_aug)

    out = out[:rows]
    return out.reshape(b, c * out_cols)


def _reference(x, temperature, pos_dim):
    b, c, h, w = x.shape
    feature = x.reshape(b, c, -1)
    weight = jax.nn.softmax(feature / temperature[0], axis=-1)
    presence = jnp.max(feature, axis=-1)
    pos = positional_encoding_2d(pos_dim, h, w, dtype=x.dtype).reshape(pos_dim, -1)
    kp = jnp.einsum("bcs,ps->bcp", weight, pos)
    out = jnp.concatenate([kp, presence[..., None]], axis=-1)
    return out.reshape(b, c * (pos_dim + 1))


if __name__ == "__main__":
    key = jax.random.PRNGKey(0)
    b, c, h, w = 2, 4, 16, 16
    pos_dim = c  # module semantics require input channels == pos_dim

    x = jax.random.normal(key, (b, c, h, w), dtype=jnp.float32)
    # deterministic parameter init: nn.Parameter(torch.ones(1) * temperature), temperature=1.0
    temperature = jnp.ones((1,), dtype=jnp.float32)

    out = spatial_softmax_positional(x, temperature, pos_dim)
    out = jax.block_until_ready(out)

    ref = _reference(x, temperature, pos_dim)
    assert out.shape == (b, c * (pos_dim + 1)), out.shape
    assert jnp.allclose(out, ref, atol=1e-5, rtol=1e-5), "mismatch vs pure-JAX reference"
    print("KERNEL_OK")
</pallas_src>

<mosaic_0001>
module attributes {stable_mosaic.version = 11 : i64} {
  func.func @_spatial_softmax_kernel(%arg0: i32, %arg1: memref<1xf32, #tpu.memory_space<smem>>, %arg2: memref<8x256xf32, #tpu.memory_space<vmem>>, %arg3: memref<256x5xf32, #tpu.memory_space<vmem>>, %arg4: memref<8x5xf32, #tpu.memory_space<vmem>>) attributes {dimension_semantics = [#tpu.dimension_semantics<parallel>], iteration_bounds = array<i64: 1>, scalar_prefetch = 0 : i64, scratch_operands = 0 : i64, tpu.core_type = #tpu.core_type<tc>, window_params = [{transform_indices = @transform_0, window_bounds = array<i64: 1>}, {transform_indices = @transform_1, window_bounds = array<i64: 8, 256>}, {pipeline_mode = #tpu.pipeline_mode<synchronous>, transform_indices = @transform_2, window_bounds = array<i64: 256, 5>}, {transform_indices = @transform_3, window_bounds = array<i64: 8, 5>}]} {
    %c0 = arith.constant 0 : index
    %c0_0 = arith.constant 0 : index
    %0 = vector.load %arg2[%c0, %c0_0] : memref<8x256xf32, #tpu.memory_space<vmem>>, vector<8x256xf32>
    %c0_1 = arith.constant 0 : index
    %1 = memref.load %arg1[%c0_1] : memref<1xf32, #tpu.memory_space<smem>>
    %cst = arith.constant 1.000000e+00 : f32
    %2 = arith.divf %cst, %1 : f32
    %cst_2 = arith.constant dense<0xFF800000> : vector<8xf32>
    %3 = vector.multi_reduction <maximumf>, %0, %cst_2 [1] : vector<8x256xf32> to vector<8xf32>
    %4 = vector.shape_cast %3 : vector<8xf32> to vector<8x1xf32>
    %5 = vector.broadcast %4 : vector<8x1xf32> to vector<8x256xf32>
    %6 = arith.subf %0, %5 : vector<8x256xf32>
    %7 = vector.broadcast %2 : f32 to vector<8x256xf32>
    %8 = arith.mulf %6, %7 : vector<8x256xf32>
    %9 = math.exp %8 : vector<8x256xf32>
    %cst_3 = arith.constant dense<0.000000e+00> : vector<8xf32>
    %10 = vector.multi_reduction <add>, %9, %cst_3 [1] : vector<8x256xf32> to vector<8xf32>
    %11 = vector.shape_cast %10 : vector<8xf32> to vector<8x1xf32>
    %c0_4 = arith.constant 0 : index
    %c0_5 = arith.constant 0 : index
    %12 = vector.load %arg3[%c0_4, %c0_5] : memref<256x5xf32, #tpu.memory_space<vmem>>, vector<256x5xf32>
    %cst_6 = arith.constant dense<0.000000e+00> : vector<8x5xf32>
    %13 = tpu.matmul %9, %12, %cst_6 {dimension_numbers = #tpu.dot_dimension_numbers<[1], [0], [0], [1], [0, 0, 1, 1], [], []>} : vector<8x256xf32>, vector<256x5xf32>, vector<8x5xf32> -> vector<8x5xf32>
    %14 = tpu.reciprocal %11 : vector<8x1xf32> -> vector<8x1xf32>
    %15 = vector.broadcast %14 : vector<8x1xf32> to vector<8x5xf32>
    %16 = arith.mulf %13, %15 : vector<8x5xf32>
    %17 = tpu.iota {dimensions = array<i32: 1>} : vector<8x5xi32>
    %c4_i32 = arith.constant 4 : i32
    %18 = vector.broadcast %c4_i32 : i32 to vector<8x5xi32>
    %19 = arith.cmpi slt, %17, %18 : vector<8x5xi32>
    %20 = vector.shape_cast %4 : vector<8x1xf32> to vector<8x1xf32>
    %21 = vector.broadcast %20 : vector<8x1xf32> to vector<8x5xf32>
    %22 = arith.select %19, %16, %21 : vector<8x5xi1>, vector<8x5xf32>
    %c0_7 = arith.constant 0 : index
    %c0_8 = arith.constant 0 : index
    %23 = vector.load %arg4[%c0_7, %c0_8] : memref<8x5xf32, #tpu.memory_space<vmem>>, vector<8x5xf32>
    tpu.vector_store %arg4[%c0_7, %c0_8], %22 {strides = array<i32>} : memref<8x5xf32, #tpu.memory_space<vmem>>, vector<8x5xf32>,
    return
  }
  func.func @transform_0(%arg0: i32) -> i32 {
    %c0_i32 = arith.constant 0 : i32
    %c0_i32_0 = arith.constant 0 : i32
    return %c0_i32 : i32
  }
  func.func @transform_1(%arg0: i32) -> (i32, i32) {
    %c0_i32 = arith.constant 0 : i32
    %c0_i32_0 = arith.constant 0 : i32
    return %arg0, %c0_i32 : i32, i32
  }
  func.func @transform_2(%arg0: i32) -> (i32, i32) {
    %c0_i32 = arith.constant 0 : i32
    %c0_i32_0 = arith.constant 0 : i32
    %c0_i32_1 = arith.constant 0 : i32
    return %c0_i32, %c0_i32_0 : i32, i32
  }
  func.func @transform_3(%arg0: i32) -> (i32, i32) {
    %c0_i32 = arith.constant 0 : i32
    %c0_i32_0 = arith.constant 0 : i32
    return %arg0, %c0_i32 : i32, i32
  }
}

</mosaic_0001>

<llo_original>
// kernel: spatial_softmax_positional.1
$region0: #{spatial_softmax_positional.1}
  #allocation0 [shape = 'u32[]', space=smem, size = 0x4, offset = 0x4, fixed_abs, tag = 'smem constant byte address 0x4 - core index']
  #allocation1 [shape = 'u32[144,128]{1,0:T(1,128)}', space=vmem, size = 0x12000, scoped, tag = 'internal scratch']
  #allocation2 [shape = 'f32[1]{0:T(128)S(6)}', space=smem, size = 0x200, scoped, tag = 'scoped memory for spatial_softmax_positional.1']
  %s0 = inlined_call_operand.<no memory space> [shape: f32[1], index: 0, kind: input, shape index: {}]
  %s1 = inlined_call_operand.vmem [shape: f32[8,256], index: 1, kind: input, shape index: {}]
  %s2 = inlined_call_operand.vmem [shape: f32[256,5], index: 2, kind: input, shape index: {}]
  %s3 = inlined_call_operand.vmem [shape: f32[8,5], index: 3, kind: output, shape index: {}]
  %s4 = sld [smem:[#allocation0]]
  $region22: #{spatial_softmax_positional.1} parent=0
    _
  %s6 = ssub.s32 1, %s4
  %s7 = scalar_select 0, %s6, %s4
  %8 = sst [smem:[#allocation2]] %s0
  // Predicated region
  $region2: #{spatial_softmax_positional.1} parent=0 // pred_check
    _
  $region3: #{spatial_softmax_positional.1} parent=0 // pred_check_branch
    %10 = sbr.rel (0) target = $region5
  $region4: #{spatial_softmax_positional.1} parent=0 // pred_region
    _
  $region5: #{spatial_softmax_positional.1} parent=0 // pred_fallthru
    _
  // Predicated region
  $region6: #{spatial_softmax_positional.1} parent=0 // pred_check
    _
  $region7: #{spatial_softmax_positional.1} parent=0 // pred_check_branch
    %12 = sbr.rel (0) target = $region9
  $region8: #{spatial_softmax_positional.1} parent=0 // pred_region
    _
  $region9: #{spatial_softmax_positional.1} parent=0 // pred_fallthru
    _
  // Predicated region
  $region10: #{spatial_softmax_positional.1} parent=0 // pred_check
    _
  $region11: #{spatial_softmax_positional.1} parent=0 // pred_check_branch
    %14 = sbr.rel (0) target = $region13
  $region12: #{spatial_softmax_positional.1} parent=0 // pred_region
    _
  $region13: #{spatial_softmax_positional.1} parent=0 // pred_fallthru
    _
  %v15 = vld [vmem:[%s1] sm:$0xff]
  %v16 = vld [vmem:[%s1 + $0x8] sm:$0xff]
  %s17 = sld [smem:[#allocation2]]
  %v18 = vstv %s17
  %v19 = vrcp.pop %v18
  %s20 = vtos %v19
  %v21 = vmax.f32 %v15, %v16
  %22 = vmax.xlane.f32.xlu0 %v21
  %v23 = vpop.xlane.xlu0 %22
  %v24 = vsub.f32 %v15, %v23
  %v25 = vsub.f32 %v16, %v23
  %v26 = vstv %s20
  %v27 = vmul.f32 %v24, %v26
  %v28 = vmul.f32 %v25, %v26
  %v29 = vmul.f32 %v27, 1.442695
  %v30 = vpow.pop %v29
  %v31 = vmul.f32 %v28, 1.442695
  %v32 = vpow.pop %v31
  %v33 = vadd.f32 %v30, %v32
  %34 = vadd.xlane.f32.xlu0 %v33
  %v35 = vpop.xlane.xlu0 %34
  %v36 = vld [vmem:[%s2] sm:$0xff]
  %v37 = vld [vmem:[%s2 + $0x8] sm:$0xff]
  %v38 = vld [vmem:[%s2 + $0x10] sm:$0xff]
  %v39 = vld [vmem:[%s2 + $0x18] sm:$0xff]
  %v40 = vld [vmem:[%s2 + $0x20] sm:$0xff]
  %v41 = vld [vmem:[%s2 + $0x28] sm:$0xff]
  %v42 = vld [vmem:[%s2 + $0x30] sm:$0xff]
  %v43 = vld [vmem:[%s2 + $0x38] sm:$0xff]
  %v44 = vld [vmem:[%s2 + $0x40] sm:$0xff]
  %v45 = vld [vmem:[%s2 + $0x48] sm:$0xff]
  %v46 = vld [vmem:[%s2 + $0x50] sm:$0xff]
  %v47 = vld [vmem:[%s2 + $0x58] sm:$0xff]
  %v48 = vld [vmem:[%s2 + $0x60] sm:$0xff]
  %v49 = vld [vmem:[%s2 + $0x68] sm:$0xff]
  %v50 = vld [vmem:[%s2 + $0x70] sm:$0xff]
  %v51 = vld [vmem:[%s2 + $0x78] sm:$0xff]
  %v52 = vld [vmem:[%s2 + $0x80] sm:$0xff]
  %v53 = vld [vmem:[%s2 + $0x88] sm:$0xff]
  %v54 = vld [vmem:[%s2 + $0x90] sm:$0xff]
  %v55 = vld [vmem:[%s2 + $0x98] sm:$0xff]
  %v56 = vld [vmem:[%s2 + $0xa0] sm:$0xff]
  %v57 = vld [vmem:[%s2 + $0xa8] sm:$0xff]
  %v58 = vld [vmem:[%s2 + $0xb0] sm:$0xff]
  %v59 = vld [vmem:[%s2 + $0xb8] sm:$0xff]
  %v60 = vld [vmem:[%s2 + $0xc0] sm:$0xff]
  %v61 = vld [vmem:[%s2 + $0xc8] sm:$0xff]
  %v62 = vld [vmem:[%s2 + $0xd0] sm:$0xff]
  %v63 = vld [vmem:[%s2 + $0xd8] sm:$0xff]
  %v64 = vld [vmem:[%s2 + $0xe0] sm:$0xff]
  %v65 = vld [vmem:[%s2 + $0xe8] sm:$0xff]
  %v66 = vld [vmem:[%s2 + $0xf0] sm:$0xff]
  %v67 = vld [vmem:[%s2 + $0xf8] sm:$0xff]
  %68 = vmatprep.subr.mxu0 0.0
  %69 = vmatpush1.msra.mxu0 %v36
  %70 = vmatprep.subr.mxu0 0.0
  %71 = vmatpush1.msra.mxu0 %v37
  %72 = vmatprep.subr.mxu0 0.0
  %73 = vmatpush1.msra.mxu0 %v38
  %74 = vmatprep.subr.mxu0 0.0
  %75 = vmatpush1.msra.mxu0 %v39
  %76 = vmatprep.subr.mxu0 0.0
  %77 = vmatpush1.msra.mxu0 %v40
  %78 = vmatprep.subr.mxu0 0.0
  %79 = vmatpush1.msra.mxu0 %v41
  %80 = vmatprep.subr.mxu0 0.0
  %81 = vmatpush1.msra.mxu0 %v42
  %82 = vmatprep.subr.mxu0 0.0
  %83 = vmatpush1.msra.mxu0 %v43
  %84 = vmatprep.subr.mxu0 0.0
  %85 = vmatpush1.msra.mxu0 %v44
  %86 = vmatprep.subr.mxu0 0.0
  %87 = vmatpush1.msra.mxu0 %v45
  %88 = vmatprep.subr.mxu0 0.0
  %89 = vmatpush1.msra.mxu0 %v46
  %90 = vmatprep.subr.mxu0 0.0
  %91 = vmatpush1.msra.mxu0 %v47
  %92 = vmatprep.subr.mxu0 0.0
  %93 = vmatpush1.msra.mxu0 %v48
  %94 = vmatprep.subr.mxu0 0.0
  %95 = vmatpush1.msra.mxu0 %v49
  %96 = vmatprep.subr.mxu0 0.0
  %97 = vmatpush1.msra.mxu0 %v50
  %98 = vmatprep.subr.mxu0 0.0
  %99 = vmatpush1.msra.mxu0 %v51
  %100 = vmatprep.subr.mxu0 0.0
  %101 = vmatpush1.msra.mxu0 %v52
  %102 = vmatprep.subr.mxu0 0.0
  %103 = vmatpush1.msra.mxu0 %v53
  %104 = vmatprep.subr.mxu0 0.0
  %105 = vmatpush1.msra.mxu0 %v54
  %106 = vmatprep.subr.mxu0 0.0
  %107 = vmatpush1.msra.mxu0 %v55
  %108 = vmatprep.subr.mxu0 0.0
  %109 = vmatpush1.msra.mxu0 %v56
  %110 = vmatprep.subr.mxu0 0.0
  %111 = vmatpush1.msra.mxu0 %v57
  %112 = vmatprep.subr.mxu0 0.0
  %113 = vmatpush1.msra.mxu0 %v58
  %114 = vmatprep.subr.mxu0 0.0
  %115 = vmatpush1.msra.mxu0 %v59
  %116 = vmatprep.subr.mxu0 0.0
  %117 = vmatpush1.msra.mxu0 %v60
  %118 = vmatprep.subr.mxu0 0.0
  %119 = vmatpush1.msra.mxu0 %v61
  %120 = vmatprep.subr.mxu0 0.0
  %121 = vmatpush1.msra.mxu0 %v62
  %122 = vmatprep.subr.mxu0 0.0
  %123 = vmatpush1.msra.mxu0 %v63
  %124 = vmatprep.subr.mxu0 0.0
  %125 = vmatpush1.msra.mxu0 %v64
  %126 = vmatprep.subr.mxu0 0.0
  %127 = vmatpush1.msra.mxu0 %v65
  %128 = vmatprep.subr.mxu0 0.0
  %129 = vmatpush1.msra.mxu0 %v66
  %130 = vmatprep.subr.mxu0 0.0
  %131 = vmatpush1.msra.mxu0 %v67
  %132 = vmatprep.mubr.f32.mxu0 %v32
  %133 = vmatmul.mubr.f32.gmra.mrb[0].mxu0 %v30
  %v134 = vpop.f32.mrb[0].mxu0
  %v135 = vadd.f32 0.0, %v134
  %v136 = vpop.f32.mrb[0].mxu0
  %137 = vdwg.mxu0
  %v138 = vrcp.pop %v35
  %v139 = vmul.f32 %v135, %v138
  %v140 = vlaneseq
  %v141 = vand.u32 %v140, 127
  %vm142 = vcmp.lt.s32.totalorder %v141, 4
  %v143 = vsel %vm142, %v139, %v23
  %vm144 = vcmask 39936
  %145 = vst.msk [vmem:[%s3] sm:$0xff] %vm144, %v143
  // Predicated region
  $region14: #{spatial_softmax_positional.1} parent=0 // pred_check
    _
  $region15: #{spatial_softmax_positional.1} parent=0 // pred_check_branch
    %147 = sbr.rel (0) target = $region17
  $region16: #{spatial_softmax_positional.1} parent=0 // pred_region
    _
  $region17: #{spatial_softmax_positional.1} parent=0 // pred_fallthru
    _
  // Predicated region
  $region18: #{spatial_softmax_positional.1} parent=0 // pred_check
    _
  $region19: #{spatial_softmax_positional.1} parent=0 // pred_check_branch
    %149 = sbr.rel (0) target = $region21
  $region20: #{spatial_softmax_positional.1} parent=0 // pred_region
    _
  $region21: #{spatial_softmax_positional.1} parent=0 // pred_fallthru
    _

</llo_original>
